<compile_context>
chip_gen: v6e
topology: v6e:2x2x1
jax: 0.10.0
libtpu: 0.0.40
codegen_flags: <defaults>
</compile_context>

<pallas_src>
import functools

import jax
import jax.numpy as jnp
from jax.experimental import pallas as pl
from jax.experimental.pallas import tpu as pltpu

EPS = 1e-6
LANES = 128
# ~16 MiB of pipeline buffers total: 2 inputs x 2 buffers x 4 MiB blocks.
VMEM_PIPELINE_BUDGET_BYTES = 16 * 1024 * 1024
VMEM_LIMIT_BYTES = 32 * 1024 * 1024  # fits v5e/v6e (128 MiB) and v7x (64 MiB) physical VMEM


def _num_tensorcores():
    """Best-effort TensorCore-per-chip count (2 on v7x, 1 on v5e/v6e)."""
    try:
        info = pltpu.get_tpu_info()
        for attr in ("num_cores", "num_tensorcores", "tensorcore_count",
                     "cores_per_chip", "core_count"):
            v = getattr(info, attr, None)
            if isinstance(v, int) and 0 < v <= 2:
                return v
    except Exception:
        pass
    try:
        kind = jax.devices()[0].device_kind.lower()
        if "v7" in kind or "7x" in kind:
            return 2
    except Exception:
        pass
    return 1


def _charbonnier_kernel(x_ref, y_ref, o_ref, *, rows, row_block,
                        blocks_per_split, nblocks):
    split = pl.program_id(0)
    step = pl.program_id(1)

    # Zero the resident (8, 128) partial-sum block at the start of each split's
    # inner (reduction) loop.
    @pl.when(step == 0)
    def _init():
        o_ref[...] = jnp.zeros_like(o_ref)

    blk = split * blocks_per_split + step          # logical (unclamped) block id
    interior = (blk + 1) * row_block <= rows       # block fully inside valid rows
    in_bounds = blk < nblocks                      # not a duplicated clamped block

    def _accum(err):
        # Fold sublane groups onto the (8, 128) accumulator: pure VPU adds,
        # no cross-lane/cross-sublane reduce in the hot loop.
        o_ref[...] += err.reshape(row_block // 8, 8, LANES).sum(axis=0)

    # Hot path: interior blocks, no masking at all.
    @pl.when(interior)
    def _hot():
        d = x_ref[...].astype(jnp.float32) - y_ref[...].astype(jnp.float32)
        _accum(jnp.sqrt(d * d + jnp.float32(EPS)))

    # Cold path: only the final row-ragged block pays for the iota/compare/where;
    # duplicated clamped blocks (blk >= nblocks) are skipped entirely.
    @pl.when(jnp.logical_and(in_bounds, jnp.logical_not(interior)))
    def _boundary():
        rows_rem = rows - blk * row_block          # valid rows in this block
        row_ids = jax.lax.broadcasted_iota(jnp.int32, (row_block, LANES), 0)
        d = x_ref[...].astype(jnp.float32) - y_ref[...].astype(jnp.float32)
        err = jnp.sqrt(d * d + jnp.float32(EPS))
        _accum(jnp.where(row_ids < rows_rem, err, jnp.float32(0.0)))


def l1_charbonnier_loss(x, y, *, max_block_rows=None, nsplits=None):
    """Pallas equivalent of L1_Charbonnier_loss().forward(X, Y)."""
    assert x.shape == y.shape, "X and Y must have the same shape"
    n = x.size
    if n == 0:
        return jnp.float32(0.0)

    xf = jnp.ravel(x)
    yf = jnp.ravel(y)

    # Kernel consumes only the 128-aligned prefix (free metadata reshape when n
    # is already lane-aligned, which is typical for NCHW image tensors); the
    # <128-element tail is added with a tiny jnp expression -- no full-array pad.
    n_main = (n // LANES) * LANES
    tail = n - n_main

    tail_sum = jnp.float32(0.0)
    if tail:
        dt = xf[n_main:].astype(jnp.float32) - yf[n_main:].astype(jnp.float32)
        tail_sum = jnp.sum(jnp.sqrt(dt * dt + jnp.float32(EPS)))
    if n_main == 0:
        return tail_sum

    rows = n_main // LANES
    x2d = (xf if tail == 0 else xf[:n_main]).reshape(rows, LANES)
    y2d = (yf if tail == 0 else yf[:n_main]).reshape(rows, LANES)

    # Dtype-aware tiling: round row blocks to the packed sublane tile
    # (8 for f32, 16 for bf16, 32 for 8-bit), byte-budgeted against VMEM.
    itemsize = max(x.dtype.itemsize, 1)
    sublane = 8 * max(4 // itemsize, 1)
    if max_block_rows is None:
        max_block_rows = VMEM_PIPELINE_BUDGET_BYTES // (4 * LANES * itemsize)
    max_block_rows = max(sublane, (max_block_rows // sublane) * sublane)

    row_block = min(max_block_rows, pl.cdiv(rows, sublane) * sublane)
    nblocks = pl.cdiv(rows, row_block)

    # Leading split axis: 2-way only on 2-TensorCore chips (v7x); single-TC
    # chips (v5e/v6e) get nsplits=1 (no duplicated clamped block, one out tile).
    num_cores = _num_tensorcores()
    if nsplits is None:
        nsplits = num_cores
    nsplits = max(1, min(nsplits, nblocks))
    blocks_per_split = pl.cdiv(nblocks, nsplits)

    kernel = functools.partial(
        _charbonnier_kernel,
        rows=rows,
        row_block=row_block,
        blocks_per_split=blocks_per_split,
        nblocks=nblocks,
    )

    def in_map(s, i):
        # Clamp so a ragged final split never points a DMA past the array; the
        # in-kernel `blk < nblocks` guard skips the duplicated block's work.
        return (jnp.minimum(s * blocks_per_split + i, nblocks - 1), 0)

    def run(dimension_semantics):
        return pl.pallas_call(
            kernel,
            out_shape=jax.ShapeDtypeStruct((nsplits * 8, LANES), jnp.float32),
            grid_spec=pltpu.PrefetchScalarGridSpec(
                num_scalar_prefetch=0,
                grid=(nsplits, blocks_per_split),
                in_specs=[
                    pl.BlockSpec((row_block, LANES), in_map),
                    pl.BlockSpec((row_block, LANES), in_map),
                ],
                out_specs=pl.BlockSpec((8, LANES), lambda s, i: (s, 0)),
            ),
            compiler_params=pltpu.CompilerParams(
                dimension_semantics=dimension_semantics,
                vmem_limit_bytes=VMEM_LIMIT_BYTES,
            ),
        )(x2d, y2d)

    if nsplits > 1 and num_cores > 1:
        # v7x: ask for an explicit per-TensorCore split; fall back if rejected.
        try:
            partials = jax.block_until_ready(
                run((pltpu.CORE_PARALLEL, pltpu.ARBITRARY)))
        except Exception:
            partials = run(("parallel", "arbitrary"))
    else:
        sem = ("parallel", "arbitrary") if nsplits > 1 else ("arbitrary", "arbitrary")
        partials = run(sem)

    # Single tiny cross-lane reduce outside the kernel.
    return jnp.sum(partials) + tail_sum


def l1_charbonnier_loss_ref(x, y):
    d = x.astype(jnp.float32) - y.astype(jnp.float32)
    return jnp.sum(jnp.sqrt(d * d + jnp.float32(EPS)))


if __name__ == "__main__":
    key = jax.random.PRNGKey(0)

    cases = [
        # (shape, dtype, kwargs)
        ((2, 4, 16, 16), jnp.float32, {}),        # lane-aligned, single block (hot path only)
        ((2, 3, 15, 17), jnp.float32, {}),        # ragged: aligned prefix in-kernel + jnp tail
        ((4, 4, 128, 129), jnp.float32,           # multi-block, forced 2-way split, boundary +
         dict(max_block_rows=256, nsplits=2)),    # duplicated-clamped-block guard exercised
        ((2, 4, 16, 16), jnp.bfloat16, {}),       # bf16 streamed, f32 accumulation, 16-row tile
    ]

    for idx, (shape, dtype, kwargs) in enumerate(cases):
        kx, ky = jax.random.split(jax.random.fold_in(key, idx))
        X = jax.random.normal(kx, shape, dtype=jnp.float32).astype(dtype)
        Y = jax.random.normal(ky, shape, dtype=jnp.float32).astype(dtype)

        loss = jax.block_until_ready(l1_charbonnier_loss(X, Y, **kwargs))
        ref = l1_charbonnier_loss_ref(X, Y)
        assert jnp.allclose(loss, ref, rtol=2e-5, atol=1e-3), (
            shape, dtype, loss, ref)

    print("KERNEL_OK")
</pallas_src>

<mosaic_0001>
module attributes {stable_mosaic.version = 11 : i64} {
  func.func @_charbonnier_kernel(%arg0: i32, %arg1: i32, %arg2: memref<16x128xf32, #tpu.memory_space<vmem>>, %arg3: memref<16x128xf32, #tpu.memory_space<vmem>>, %arg4: memref<8x128xf32, #tpu.memory_space<vmem>>) attributes {dimension_semantics = [#tpu.dimension_semantics<arbitrary>, #tpu.dimension_semantics<arbitrary>], iteration_bounds = array<i64: 1, 1>, scalar_prefetch = 0 : i64, scratch_operands = 0 : i64, tpu.core_type = #tpu.core_type<tc>, window_params = [{transform_indices = @transform_0, window_bounds = array<i64: 16, 128>}, {transform_indices = @transform_1, window_bounds = array<i64: 16, 128>}, {transform_indices = @transform_2, window_bounds = array<i64: 8, 128>}]} {
    %c0_i32 = arith.constant 0 : i32
    %0 = arith.cmpi eq, %arg1, %c0_i32 : i32
    %1 = arith.extui %0 : i1 to i32
    %c0_i32_0 = arith.constant 0 : i32
    %2 = arith.cmpi ne, %1, %c0_i32_0 : i32
    scf.if %2 {
      %cst = arith.constant 0.000000e+00 : f32
      %15 = vector.broadcast %cst : f32 to vector<8x128xf32>
      %c0 = arith.constant 0 : index
      %c0_6 = arith.constant 0 : index
      %16 = vector.load %arg4[%c0, %c0_6] : memref<8x128xf32, #tpu.memory_space<vmem>>, vector<8x128xf32>
      tpu.vector_store %arg4[%c0, %c0_6], %15 {strides = array<i32>} : memref<8x128xf32, #tpu.memory_space<vmem>>, vector<8x128xf32>,
    } else {
    }
    %c1_i32 = arith.constant 1 : i32
    %3 = arith.muli %arg0, %c1_i32 : i32
    %4 = arith.addi %3, %arg1 : i32
    %c1_i32_1 = arith.constant 1 : i32
    %5 = arith.addi %4, %c1_i32_1 : i32
    %c16_i32 = arith.constant 16 : i32
    %6 = arith.muli %5, %c16_i32 : i32
    %c16_i32_2 = arith.constant 16 : i32
    %7 = arith.cmpi sle, %6, %c16_i32_2 : i32
    %c1_i32_3 = arith.constant 1 : i32
    %8 = arith.cmpi slt, %4, %c1_i32_3 : i32
    %9 = arith.extui %7 : i1 to i32
    %c0_i32_4 = arith.constant 0 : i32
    %10 = arith.cmpi ne, %9, %c0_i32_4 : i32
    scf.if %10 {
      %c0 = arith.constant 0 : index
      %c0_6 = arith.constant 0 : index
      %15 = vector.load %arg2[%c0, %c0_6] : memref<16x128xf32, #tpu.memory_space<vmem>>, vector<16x128xf32>
      %c0_7 = arith.constant 0 : index
      %c0_8 = arith.constant 0 : index
      %16 = vector.load %arg3[%c0_7, %c0_8] : memref<16x128xf32, #tpu.memory_space<vmem>>, vector<16x128xf32>
      %17 = arith.subf %15, %16 : vector<16x128xf32>
      %18 = arith.mulf %17, %17 : vector<16x128xf32>
      %cst = arith.constant 9.99999997E-7 : f32
      %19 = vector.broadcast %cst : f32 to vector<16x128xf32>
      %20 = arith.addf %18, %19 : vector<16x128xf32>
      %21 = math.sqrt %20 : vector<16x128xf32>
      %c0_9 = arith.constant 0 : index
      %c0_10 = arith.constant 0 : index
      %22 = vector.load %arg4[%c0_9, %c0_10] : memref<8x128xf32, #tpu.memory_space<vmem>>, vector<8x128xf32>
      %23 = vector.shape_cast %21 : vector<16x128xf32> to vector<2x8x128xf32>
      %cst_11 = arith.constant dense<0.000000e+00> : vector<8x128xf32>
      %24 = vector.multi_reduction <add>, %23, %cst_11 [0] : vector<2x8x128xf32> to vector<8x128xf32>
      %25 = arith.addf %22, %24 : vector<8x128xf32>
      %c0_12 = arith.constant 0 : index
      %c0_13 = arith.constant 0 : index
      %26 = vector.load %arg4[%c0_12, %c0_13] : memref<8x128xf32, #tpu.memory_space<vmem>>, vector<8x128xf32>
      tpu.vector_store %arg4[%c0_12, %c0_13], %25 {strides = array<i32>} : memref<8x128xf32, #tpu.memory_space<vmem>>, vector<8x128xf32>,
    } else {
    }
    %true = arith.constant true
    %11 = arith.xori %7, %true : i1
    %12 = arith.andi %8, %11 : i1
    %13 = arith.extui %12 : i1 to i32
    %c0_i32_5 = arith.constant 0 : i32
    %14 = arith.cmpi ne, %13, %c0_i32_5 : i32
    scf.if %14 {
      %c16_i32_6 = arith.constant 16 : i32
      %15 = arith.muli %4, %c16_i32_6 : i32
      %c16_i32_7 = arith.constant 16 : i32
      %16 = arith.subi %c16_i32_7, %15 : i32
      %17 = tpu.iota {dimensions = array<i32: 0>} : vector<16x128xi32>
      %c0 = arith.constant 0 : index
      %c0_8 = arith.constant 0 : index
      %18 = vector.load %arg2[%c0, %c0_8] : memref<16x128xf32, #tpu.memory_space<vmem>>, vector<16x128xf32>
      %c0_9 = arith.constant 0 : index
      %c0_10 = arith.constant 0 : index
      %19 = vector.load %arg3[%c0_9, %c0_10] : memref<16x128xf32, #tpu.memory_space<vmem>>, vector<16x128xf32>
      %20 = arith.subf %18, %19 : vector<16x128xf32>
      %21 = arith.mulf %20, %20 : vector<16x128xf32>
      %cst = arith.constant 9.99999997E-7 : f32
      %22 = vector.broadcast %cst : f32 to vector<16x128xf32>
      %23 = arith.addf %21, %22 : vector<16x128xf32>
      %24 = math.sqrt %23 : vector<16x128xf32>
      %25 = vector.broadcast %16 : i32 to vector<16x128xi32>
      %26 = arith.cmpi slt, %17, %25 : vector<16x128xi32>
      %cst_11 = arith.constant 0.000000e+00 : f32
      %27 = vector.broadcast %cst_11 : f32 to vector<16x128xf32>
      %28 = arith.select %26, %24, %27 : vector<16x128xi1>, vector<16x128xf32>
      %c0_12 = arith.constant 0 : index
      %c0_13 = arith.constant 0 : index
      %29 = vector.load %arg4[%c0_12, %c0_13] : memref<8x128xf32, #tpu.memory_space<vmem>>, vector<8x128xf32>
      %30 = vector.shape_cast %28 : vector<16x128xf32> to vector<2x8x128xf32>
      %cst_14 = arith.constant dense<0.000000e+00> : vector<8x128xf32>
      %31 = vector.multi_reduction <add>, %30, %cst_14 [0] : vector<2x8x128xf32> to vector<8x128xf32>
      %32 = arith.addf %29, %31 : vector<8x128xf32>
      %c0_15 = arith.constant 0 : index
      %c0_16 = arith.constant 0 : index
      %33 = vector.load %arg4[%c0_15, %c0_16] : memref<8x128xf32, #tpu.memory_space<vmem>>, vector<8x128xf32>
      tpu.vector_store %arg4[%c0_15, %c0_16], %32 {strides = array<i32>} : memref<8x128xf32, #tpu.memory_space<vmem>>, vector<8x128xf32>,
    } else {
    }
    return
  }
  func.func @transform_0(%arg0: i32, %arg1: i32) -> (i32, i32) {
    %c1_i32 = arith.constant 1 : i32
    %0 = arith.muli %arg0, %c1_i32 : i32
    %1 = arith.addi %0, %arg1 : i32
    %c0_i32 = arith.constant 0 : i32
    %2 = arith.minsi %1, %c0_i32 : i32
    %c0_i32_0 = arith.constant 0 : i32
    %c0_i32_1 = arith.constant 0 : i32
    return %2, %c0_i32_0 : i32, i32
  }
  func.func @transform_1(%arg0: i32, %arg1: i32) -> (i32, i32) {
    %c1_i32 = arith.constant 1 : i32
    %0 = arith.muli %arg0, %c1_i32 : i32
    %1 = arith.addi %0, %arg1 : i32
    %c0_i32 = arith.constant 0 : i32
    %2 = arith.minsi %1, %c0_i32 : i32
    %c0_i32_0 = arith.constant 0 : i32
    %c0_i32_1 = arith.constant 0 : i32
    return %2, %c0_i32_0 : i32, i32
  }
  func.func @transform_2(%arg0: i32, %arg1: i32) -> (i32, i32) {
    %c0_i32 = arith.constant 0 : i32
    %c0_i32_0 = arith.constant 0 : i32
    return %arg0, %c0_i32 : i32, i32
  }
}

</mosaic_0001>

<llo_original>
// kernel: tpu_custom_call.1
$region0: #{tpu_custom_call.1}
  #allocation0 [shape = 'u32[]', space=smem, size = 0x4, offset = 0x4, fixed_abs, tag = 'smem constant byte address 0x4 - core index']
  #allocation1 [shape = 'u32[144,128]{1,0:T(1,128)}', space=vmem, size = 0x12000, scoped, tag = 'internal scratch']
  %s0 = inlined_call_operand.hbm [shape: f32[16,128], index: 0, kind: input, shape index: {}]
  %s1 = inlined_call_operand.hbm [shape: f32[16,128], index: 1, kind: input, shape index: {}]
  %s2 = inlined_call_operand.hbm [shape: f32[8,128], index: 2, kind: output, shape index: {}]
  %s3 = sld [smem:[#allocation0]]
  $region38: #{tpu_custom_call.1} parent=0
    _
  %s5 = ssub.s32 1, %s3
  %s6 = scalar_select 0, %s5, %s3
  $region1: #{tpu_custom_call.1} parent=0
    #allocation2 [shape = 'u8[8192]{0}', space=vmem, size = 0x2000, scoped, tag = 'input window, operand 0, single buffered']
    #allocation3 [shape = 's32[1]{0}', space=sflag, size = 0x4, scoped, tag = 'scoped memory for tpu_custom_call.1']
    #allocation4 [shape = 's32[1]{0}', space=sflag, size = 0x4, scoped, tag = 'scoped memory for tpu_custom_call.1']
    #allocation5 [shape = 'u8[8192]{0}', space=vmem, size = 0x2000, scoped, tag = 'input window, operand 1, single buffered']
    #allocation6 [shape = 's32[1]{0}', space=sflag, size = 0x4, scoped, tag = 'scoped memory for tpu_custom_call.1']
    #allocation7 [shape = 'u8[4096]{0}', space=vmem, size = 0x1000, scoped, tag = 'output window, operand 0, single buffered']
    %7 = vsyncpa [#allocation3], 0
    %8 = vsyncpa [#allocation6], 0
    %9 = vsyncpa [#allocation4], 0
    // Predicated region
    $region2: #{tpu_custom_call.1} parent=1 // pred_check
      _
    $region3: #{tpu_custom_call.1} parent=1 // pred_check_branch
      %11 = sbr.rel (0) target = $region5
    $region4: #{tpu_custom_call.1} parent=1 // pred_region
      %s12 = sadd.s32 0, 0
      %p13 = scmp.lt.s32.totalorder %s12, 0
      %s14 = scalar_select %p13, %s12, 0
      %s15 = smul.u32 2, %s14
      %s17 = ssub.s32 256, 256
      %18 = vsyncadd [#allocation3], %s17
      %s19 = smul.addr %s15, 128
      %s20 = scalar_lea.hbm %s0, %s19
      %s21 = sshll.u32 [#allocation2], 4
      %s22 = int_to_ptr.vmem [resolvable:$true] %s21
      %27 = dma.hbm_to_vmem [thread:$0]  %s20, 256, %s22, [#allocation3], 128, 128, 8
    $region5: #{tpu_custom_call.1} parent=1 // pred_fallthru
      _
    // Predicated region
    $region6: #{tpu_custom_call.1} parent=1 // pred_check
      _
    $region7: #{tpu_custom_call.1} parent=1 // pred_check_branch
      %29 = sbr.rel (0) target = $region9
    $region8: #{tpu_custom_call.1} parent=1 // pred_region
      %s30 = sadd.s32 0, 0
      %p31 = scmp.lt.s32.totalorder %s30, 0
      %s32 = scalar_select %p31, %s30, 0
      %s33 = smul.u32 2, %s32
      %s35 = ssub.s32 256, 256
      %36 = vsyncadd [#allocation6], %s35
      %s37 = smul.addr %s33, 128
      %s38 = scalar_lea.hbm %s1, %s37
      %s39 = sshll.u32 [#allocation5], 4
      %s40 = int_to_ptr.vmem [resolvable:$true] %s39
      %45 = dma.hbm_to_vmem [thread:$0]  %s38, 256, %s40, [#allocation6], 128, 128, 8
    $region9: #{tpu_custom_call.1} parent=1 // pred_fallthru
      _
    // Predicated region
    $region10: #{tpu_custom_call.1} parent=1 // pred_check
      _
    $region11: #{tpu_custom_call.1} parent=1 // pred_check_branch
      %47 = sbr.rel (0) target = $region13
    $region12: #{tpu_custom_call.1} parent=1 // pred_region
      %48 = dma.done [#allocation3], 256
    $region13: #{tpu_custom_call.1} parent=1 // pred_fallthru
      _
    // Predicated region
    $region14: #{tpu_custom_call.1} parent=1 // pred_check
      _
    $region15: #{tpu_custom_call.1} parent=1 // pred_check_branch
      %50 = sbr.rel (0) target = $region17
    $region16: #{tpu_custom_call.1} parent=1 // pred_region
      %51 = dma.done [#allocation6], 256
    $region17: #{tpu_custom_call.1} parent=1 // pred_fallthru
      _
    %s52 = sadd.s32 0, 0
    %p53 = scmp.lt.s32.totalorder %s52, 0
    %s54 = scalar_select %p53, %s52, 0
    %s55 = smul.u32 2, %s54
    %s56 = sadd.s32 0, 0
    %p57 = scmp.lt.s32.totalorder %s56, 0
    %s58 = scalar_select %p57, %s56, 0
    %s59 = smul.u32 2, %s58
    %p60 = scmp.eq.s32.totalorder 0, 0
    // Predicated region
    $region18: #{tpu_custom_call.1} parent=1 // pred_check
      %p61 = pneg %p60
    $region19: #{tpu_custom_call.1} parent=1 // pred_check_branch
      %63 = sbr.rel (%p61) target = $region21
    $region20: #{tpu_custom_call.1} parent=1 // pred_region
      %64 = vst [vmem:[#allocation7] sm:$0xff] 0.0
    $region21: #{tpu_custom_call.1} parent=1 // pred_fallthru
      _
    %s65 = sadd.s32 0, 0
    %s66 = sadd.s32 %s65, 1
    %s67 = smul.u32 %s66, 16
    %p68 = scmp.le.s32.totalorder %s67, 16
    %p69 = scmp.lt.s32.totalorder %s65, 1
    // Predicated region
    $region22: #{tpu_custom_call.1} parent=1 // pred_check
      %p70 = pneg %p68
    $region23: #{tpu_custom_call.1} parent=1 // pred_check_branch
      %72 = sbr.rel (%p70) target = $region25
    $region24: #{tpu_custom_call.1} parent=1 // pred_region
      %v73 = vld [vmem:[#allocation2] sm:$0xff]
      %v74 = vld [vmem:[#allocation2 + $0x8] sm:$0xff]
      %v75 = vld [vmem:[#allocation5] sm:$0xff]
      %v76 = vld [vmem:[#allocation5 + $0x8] sm:$0xff]
      %v77 = vsub.f32 %v73, %v75
      %v78 = vsub.f32 %v74, %v76
      %v79 = vmul.f32 %v77, %v77
      %v80 = vmul.f32 %v78, %v78
      %v81 = vadd.f32 %v79, 1e-06
      %v82 = vadd.f32 %v80, 1e-06
      %v83 = vrsqrt.pop %v81
      %v84 = vmul.f32 %v81, %v83
      %vm85 = vcmp.eq.f32.partialorder %v81, inf
      %v86 = vsel %vm85, %v81, %v84
      %vm87 = vcmp.eq.f32.partialorder %v81, 0.0
      %v88 = vand.u32 %v81, 2147483648
      %v89 = vsel %vm87, %v88, %v86
      %v90 = vrsqrt.pop %v82
      %v91 = vmul.f32 %v82, %v90
      %vm92 = vcmp.eq.f32.partialorder %v82, inf
      %v93 = vsel %vm92, %v82, %v91
      %vm94 = vcmp.eq.f32.partialorder %v82, 0.0
      %v95 = vand.u32 %v82, 2147483648
      %v96 = vsel %vm94, %v95, %v93
      %v97 = vld [vmem:[#allocation7] sm:$0xff]
      %v98 = vadd.f32 %v89, %v96
      %v99 = vadd.f32 %v97, %v98
      %100 = vst [vmem:[#allocation7] sm:$0xff] %v99
    $region25: #{tpu_custom_call.1} parent=1 // pred_fallthru
      _
    %p101 = scmp.gt.s32.totalorder %s67, 16
    %p102 = pnand %p69, %p101
    %p103 = pneg %p102
    // Predicated region
    $region26: #{tpu_custom_call.1} parent=1 // pred_check
      _
    $region27: #{tpu_custom_call.1} parent=1 // pred_check_branch
      %105 = sbr.rel (%p102) target = $region29
    $region28: #{tpu_custom_call.1} parent=1 // pred_region
      %s106 = smul.u32 %s65, 16
      %s107 = ssub.s32 16, %s106
      %v108 = vlaneseq
      %v109 = vshrl.u32 %v108, 7
      %v110 = vadd.s32 %v109, 8
      %v111 = vld [vmem:[#allocation2] sm:$0xff]
      %v112 = vld [vmem:[#allocation2 + $0x8] sm:$0xff]
      %v113 = vld [vmem:[#allocation5] sm:$0xff]
      %v114 = vld [vmem:[#allocation5 + $0x8] sm:$0xff]
      %v115 = vsub.f32 %v111, %v113
      %v116 = vsub.f32 %v112, %v114
      %v117 = vmul.f32 %v115, %v115
      %v118 = vmul.f32 %v116, %v116
      %v119 = vadd.f32 %v117, 1e-06
      %v120 = vadd.f32 %v118, 1e-06
      %v121 = vrsqrt.pop %v119
      %v122 = vmul.f32 %v119, %v121
      %vm123 = vcmp.eq.f32.partialorder %v119, inf
      %v124 = vsel %vm123, %v119, %v122
      %vm125 = vcmp.eq.f32.partialorder %v119, 0.0
      %v126 = vand.u32 %v119, 2147483648
      %v127 = vsel %vm125, %v126, %v124
      %v128 = vrsqrt.pop %v120
      %v129 = vmul.f32 %v120, %v128
      %vm130 = vcmp.eq.f32.partialorder %v120, inf
      %v131 = vsel %vm130, %v120, %v129
      %vm132 = vcmp.eq.f32.partialorder %v120, 0.0
      %v133 = vand.u32 %v120, 2147483648
      %v134 = vsel %vm132, %v133, %v131
      %v135 = vstv %s107
      %vm136 = vcmp.lt.s32.totalorder %v109, %v135
      %vm137 = vcmp.lt.s32.totalorder %v110, %v135
      %v138 = vsel %vm136, %v127, 0.0
      %v139 = vsel %vm137, %v134, 0.0
      %v140 = vld [vmem:[#allocation7] sm:$0xff]
      %v141 = vadd.f32 %v138, %v139
      %v142 = vadd.f32 %v140, %v141
      %143 = vst [vmem:[#allocation7] sm:$0xff] %v142
    $region29: #{tpu_custom_call.1} parent=1 // pred_fallthru
      _
    // Predicated region
    $region30: #{tpu_custom_call.1} parent=1 // pred_check
      _
    $region31: #{tpu_custom_call.1} parent=1 // pred_check_branch
      %145 = sbr.rel (0) target = $region33
    $region32: #{tpu_custom_call.1} parent=1 // pred_region
      %s147 = ssub.s32 128, 128
      %148 = vsyncadd [#allocation4], %s147
      %s150 = sshll.u32 [#allocation7], 4
      %s151 = int_to_ptr.vmem [resolvable:$true] %s150
      %153 = dma.vmem_to_hbm [thread:$0]  %s151, 128, %s2, [#allocation4]
    $region33: #{tpu_custom_call.1} parent=1 // pred_fallthru
      _
    // Predicated region
    $region34: #{tpu_custom_call.1} parent=1 // pred_check
      _
    $region35: #{tpu_custom_call.1} parent=1 // pred_check_branch
      %155 = sbr.rel (0) target = $region37
    $region36: #{tpu_custom_call.1} parent=1 // pred_region
      %156 = dma.done [#allocation4], 128
    $region37: #{tpu_custom_call.1} parent=1 // pred_fallthru
      _
    %157 = vsyncpa [#allocation3], 1
    %158 = vsyncpa [#allocation6], 1
    %159 = vsyncpa [#allocation4], 1

</llo_original>
